<compile_context>
chip_gen: v5e
topology: v5e:2x2
jax: 0.10.0
libtpu: 0.0.40
codegen_flags: <defaults>
</compile_context>

<pallas_src>
import jax
import jax.numpy as jnp
from jax.experimental import pallas as pl
from jax.experimental.pallas import tpu as pltpu

IN_DIM = 9
HIDDEN = 128
OUT_DIM = 9
K_PAD = 16      # pad the 9-wide input contraction to a clean sublane multiple
OUT_PAD = 128   # lane-dense padded output width


def _round_up(a, m):
    return ((a + m - 1) // m) * m


def _critic_kernel(x_ref, w1_ref, b1_ref, w2_ref, b2_ref, w3_ref, b3_ref, o_ref):
    # One (TILE_B, K_PAD) batch tile per grid step; weights resident in VMEM.
    x = x_ref[...]                                                      # (TILE_B, 16)

    h1 = jnp.dot(x, w1_ref[...], preferred_element_type=jnp.float32)   # (TILE_B, 128)
    h1 = jnp.maximum(h1 + b1_ref[...], 0.0)                            # ReLU (f32, VPU)

    h2 = jnp.dot(h1, w2_ref[...], preferred_element_type=jnp.float32)  # (TILE_B, 128)
    h2 = jnp.maximum(h2 + b2_ref[...], 0.0)                            # ReLU

    out = jnp.dot(h2, w3_ref[...], preferred_element_type=jnp.float32)  # (TILE_B, 128), lane-dense
    o_ref[...] = (out + b3_ref[...]).astype(o_ref.dtype)


def critic_forward(x, params, *, tile_b=512):
    """Forward pass of the 3-layer MLP critic. x: (B, 9) float32 -> (B, 9)."""
    w1, b1, w2, b2, w3, b3 = params
    B = x.shape[0]

    # --- layout plumbing (free / folded under jit) -------------------------
    # Pad input features 9 -> 16 and W1 rows to match (zero rows: no effect).
    x_pad = jnp.pad(x.astype(jnp.float32), ((0, 0), (0, K_PAD - IN_DIM)))
    w1_pad = jnp.pad(w1, ((0, K_PAD - IN_DIM), (0, 0)))                 # (16, 128)
    # Pad output width 9 -> 128 (zero columns) so the store is lane-dense.
    w3_pad = jnp.pad(w3, ((0, 0), (0, OUT_PAD - OUT_DIM)))              # (128, 128)
    b3_pad = jnp.pad(b3, ((0, 0), (0, OUT_PAD - OUT_DIM)))              # (1, 128)

    # --- batch tiling -------------------------------------------------------
    # For tiny batches shrink the tile; keep it a multiple of 8 sublanes.
    tb = min(tile_b, _round_up(B, 8))
    Bp = _round_up(B, tb)
    if Bp != B:
        x_pad = jnp.pad(x_pad, ((0, Bp - B), (0, 0)))
    grid = (Bp // tb,)

    x_spec = pl.BlockSpec((tb, K_PAD), lambda i: (i, 0))
    out_spec = pl.BlockSpec((tb, OUT_PAD), lambda i: (i, 0))
    resident = lambda shape: pl.BlockSpec(shape, lambda i: (0, 0))  # stays in VMEM

    flops = 2 * B * (IN_DIM * HIDDEN + HIDDEN * HIDDEN + HIDDEN * OUT_DIM)
    weight_bytes = 4 * (K_PAD * HIDDEN + HIDDEN + HIDDEN * HIDDEN + HIDDEN
                        + HIDDEN * OUT_PAD + OUT_PAD)
    bytes_accessed = 4 * Bp * (K_PAD + OUT_PAD) + weight_bytes

    out_padded = pl.pallas_call(
        _critic_kernel,
        out_shape=jax.ShapeDtypeStruct((Bp, OUT_PAD), jnp.float32),
        grid_spec=pltpu.PrefetchScalarGridSpec(
            num_scalar_prefetch=0,
            grid=grid,
            in_specs=[
                x_spec,
                resident((K_PAD, HIDDEN)),   # W1
                resident((1, HIDDEN)),       # b1
                resident((HIDDEN, HIDDEN)),  # W2
                resident((1, HIDDEN)),       # b2
                resident((HIDDEN, OUT_PAD)),  # W3 (padded)
                resident((1, OUT_PAD)),       # b3 (padded)
            ],
            out_specs=out_spec,
        ),
        compiler_params=pltpu.CompilerParams(
            dimension_semantics=("parallel",),   # megacore sharding on v7x
        ),
        cost_estimate=pl.CostEstimate(
            flops=flops, transcendentals=0, bytes_accessed=bytes_accessed),
    )(x_pad, w1_pad, b1, w2, b2, w3_pad, b3_pad)

    # Strip batch padding and the zero output lanes.
    return out_padded[:B, :OUT_DIM]


def init_params(key):
    """Deterministic init matching nn.Linear shapes (weights stored as (in, out))."""
    dims = [(IN_DIM, HIDDEN), (HIDDEN, HIDDEN), (HIDDEN, OUT_DIM)]
    params = []
    for fan_in, fan_out in dims:
        kw, kb, key = jax.random.split(key, 3)
        bound = 1.0 / (fan_in ** 0.5)  # same uniform bound torch.nn.Linear uses
        w = jax.random.uniform(kw, (fan_in, fan_out), jnp.float32, -bound, bound)
        b = jax.random.uniform(kb, (1, fan_out), jnp.float32, -bound, bound)
        params.extend([w, b])
    return tuple(params)


def critic_reference(x, params):
    """Plain-JAX reference of the forward pass for verification."""
    w1, b1, w2, b2, w3, b3 = params
    h1 = jnp.maximum(x @ w1 + b1, 0.0)
    h2 = jnp.maximum(h1 @ w2 + b2, 0.0)
    return h2 @ w3 + b3


if __name__ == "__main__":
    key = jax.random.PRNGKey(0)
    kx, kp = jax.random.split(key)

    params = init_params(kp)

    # Small batch of 9-dim states (e.g. tic-tac-toe board).
    B = 8
    x = jax.random.normal(kx, (B, 9), jnp.float32)
    out = jax.block_until_ready(critic_forward(x, params))
    ref = critic_reference(x, params)
    assert out.shape == (B, OUT_DIM)
    assert jnp.allclose(out, ref, atol=1e-5, rtol=1e-5)

    # Also exercise the tiled / padded path (B not a multiple of the tile).
    B2 = 1037
    x2 = jax.random.normal(kx, (B2, 9), jnp.float32)
    out2 = jax.block_until_ready(critic_forward(x2, params))
    ref2 = critic_reference(x2, params)
    assert out2.shape == (B2, OUT_DIM)
    assert jnp.allclose(out2, ref2, atol=1e-4, rtol=1e-4)

    print("KERNEL_OK")
</pallas_src>

<mosaic_0001>
module attributes {stable_mosaic.version = 11 : i64} {
  func.func @_critic_kernel(%arg0: i32, %arg1: memref<8x16xf32, #tpu.memory_space<vmem>>, %arg2: memref<16x128xf32, #tpu.memory_space<vmem>>, %arg3: memref<1x128xf32, #tpu.memory_space<vmem>>, %arg4: memref<128x128xf32, #tpu.memory_space<vmem>>, %arg5: memref<1x128xf32, #tpu.memory_space<vmem>>, %arg6: memref<128x128xf32, #tpu.memory_space<vmem>>, %arg7: memref<1x128xf32, #tpu.memory_space<vmem>>, %arg8: memref<8x128xf32, #tpu.memory_space<vmem>>) attributes {dimension_semantics = [#tpu.dimension_semantics<parallel>], iteration_bounds = array<i64: 1>, scalar_prefetch = 0 : i64, scratch_operands = 0 : i64, tpu.core_type = #tpu.core_type<tc>, window_params = [{transform_indices = @transform_0, window_bounds = array<i64: 8, 16>}, {pipeline_mode = #tpu.pipeline_mode<synchronous>, transform_indices = @transform_1, window_bounds = array<i64: 16, 128>}, {pipeline_mode = #tpu.pipeline_mode<synchronous>, transform_indices = @transform_2, window_bounds = array<i64: 1, 128>}, {pipeline_mode = #tpu.pipeline_mode<synchronous>, transform_indices = @transform_3, window_bounds = array<i64: 128, 128>}, {pipeline_mode = #tpu.pipeline_mode<synchronous>, transform_indices = @transform_4, window_bounds = array<i64: 1, 128>}, {pipeline_mode = #tpu.pipeline_mode<synchronous>, transform_indices = @transform_5, window_bounds = array<i64: 128, 128>}, {pipeline_mode = #tpu.pipeline_mode<synchronous>, transform_indices = @transform_6, window_bounds = array<i64: 1, 128>}, {transform_indices = @transform_7, window_bounds = array<i64: 8, 128>}]} {
    %c0 = arith.constant 0 : index
    %c0_0 = arith.constant 0 : index
    %0 = vector.load %arg1[%c0, %c0_0] : memref<8x16xf32, #tpu.memory_space<vmem>>, vector<8x16xf32>
    %c0_1 = arith.constant 0 : index
    %c0_2 = arith.constant 0 : index
    %1 = vector.load %arg2[%c0_1, %c0_2] : memref<16x128xf32, #tpu.memory_space<vmem>>, vector<16x128xf32>
    %cst = arith.constant dense<0.000000e+00> : vector<8x128xf32>
    %2 = tpu.matmul %0, %1, %cst {dimension_numbers = #tpu.dot_dimension_numbers<[1], [0], [0], [1], [0, 0, 1, 1], [], []>} : vector<8x16xf32>, vector<16x128xf32>, vector<8x128xf32> -> vector<8x128xf32>
    %c0_3 = arith.constant 0 : index
    %c0_4 = arith.constant 0 : index
    %3 = vector.load %arg3[%c0_3, %c0_4] : memref<1x128xf32, #tpu.memory_space<vmem>>, vector<1x128xf32>
    %4 = vector.broadcast %3 : vector<1x128xf32> to vector<8x128xf32>
    %5 = arith.addf %2, %4 : vector<8x128xf32>
    %cst_5 = arith.constant 0.000000e+00 : f32
    %6 = vector.broadcast %cst_5 : f32 to vector<8x128xf32>
    %7 = arith.maximumf %5, %6 : vector<8x128xf32>
    %c0_6 = arith.constant 0 : index
    %c0_7 = arith.constant 0 : index
    %8 = vector.load %arg4[%c0_6, %c0_7] : memref<128x128xf32, #tpu.memory_space<vmem>>, vector<128x128xf32>
    %cst_8 = arith.constant dense<0.000000e+00> : vector<8x128xf32>
    %9 = tpu.matmul %7, %8, %cst_8 {dimension_numbers = #tpu.dot_dimension_numbers<[1], [0], [0], [1], [0, 0, 1, 1], [], []>} : vector<8x128xf32>, vector<128x128xf32>, vector<8x128xf32> -> vector<8x128xf32>
    %c0_9 = arith.constant 0 : index
    %c0_10 = arith.constant 0 : index
    %10 = vector.load %arg5[%c0_9, %c0_10] : memref<1x128xf32, #tpu.memory_space<vmem>>, vector<1x128xf32>
    %11 = vector.broadcast %10 : vector<1x128xf32> to vector<8x128xf32>
    %12 = arith.addf %9, %11 : vector<8x128xf32>
    %cst_11 = arith.constant 0.000000e+00 : f32
    %13 = vector.broadcast %cst_11 : f32 to vector<8x128xf32>
    %14 = arith.maximumf %12, %13 : vector<8x128xf32>
    %c0_12 = arith.constant 0 : index
    %c0_13 = arith.constant 0 : index
    %15 = vector.load %arg6[%c0_12, %c0_13] : memref<128x128xf32, #tpu.memory_space<vmem>>, vector<128x128xf32>
    %cst_14 = arith.constant dense<0.000000e+00> : vector<8x128xf32>
    %16 = tpu.matmul %14, %15, %cst_14 {dimension_numbers = #tpu.dot_dimension_numbers<[1], [0], [0], [1], [0, 0, 1, 1], [], []>} : vector<8x128xf32>, vector<128x128xf32>, vector<8x128xf32> -> vector<8x128xf32>
    %c0_15 = arith.constant 0 : index
    %c0_16 = arith.constant 0 : index
    %17 = vector.load %arg7[%c0_15, %c0_16] : memref<1x128xf32, #tpu.memory_space<vmem>>, vector<1x128xf32>
    %18 = vector.broadcast %17 : vector<1x128xf32> to vector<8x128xf32>
    %19 = arith.addf %16, %18 : vector<8x128xf32>
    %c0_17 = arith.constant 0 : index
    %c0_18 = arith.constant 0 : index
    %20 = vector.load %arg8[%c0_17, %c0_18] : memref<8x128xf32, #tpu.memory_space<vmem>>, vector<8x128xf32>
    tpu.vector_store %arg8[%c0_17, %c0_18], %19 {strides = array<i32>} : memref<8x128xf32, #tpu.memory_space<vmem>>, vector<8x128xf32>,
    return
  }
  func.func @transform_0(%arg0: i32) -> (i32, i32) {
    %c0_i32 = arith.constant 0 : i32
    %c0_i32_0 = arith.constant 0 : i32
    return %arg0, %c0_i32 : i32, i32
  }
  func.func @transform_1(%arg0: i32) -> (i32, i32) {
    %c0_i32 = arith.constant 0 : i32
    %c0_i32_0 = arith.constant 0 : i32
    %c0_i32_1 = arith.constant 0 : i32
    return %c0_i32, %c0_i32_0 : i32, i32
  }
  func.func @transform_2(%arg0: i32) -> (i32, i32) {
    %c0_i32 = arith.constant 0 : i32
    %c0_i32_0 = arith.constant 0 : i32
    %c0_i32_1 = arith.constant 0 : i32
    return %c0_i32, %c0_i32_0 : i32, i32
  }
  func.func @transform_3(%arg0: i32) -> (i32, i32) {
    %c0_i32 = arith.constant 0 : i32
    %c0_i32_0 = arith.constant 0 : i32
    %c0_i32_1 = arith.constant 0 : i32
    return %c0_i32, %c0_i32_0 : i32, i32
  }
  func.func @transform_4(%arg0: i32) -> (i32, i32) {
    %c0_i32 = arith.constant 0 : i32
    %c0_i32_0 = arith.constant 0 : i32
    %c0_i32_1 = arith.constant 0 : i32
    return %c0_i32, %c0_i32_0 : i32, i32
  }
  func.func @transform_5(%arg0: i32) -> (i32, i32) {
    %c0_i32 = arith.constant 0 : i32
    %c0_i32_0 = arith.constant 0 : i32
    %c0_i32_1 = arith.constant 0 : i32
    return %c0_i32, %c0_i32_0 : i32, i32
  }
  func.func @transform_6(%arg0: i32) -> (i32, i32) {
    %c0_i32 = arith.constant 0 : i32
    %c0_i32_0 = arith.constant 0 : i32
    %c0_i32_1 = arith.constant 0 : i32
    return %c0_i32, %c0_i32_0 : i32, i32
  }
  func.func @transform_7(%arg0: i32) -> (i32, i32) {
    %c0_i32 = arith.constant 0 : i32
    %c0_i32_0 = arith.constant 0 : i32
    return %arg0, %c0_i32 : i32, i32
  }
}

</mosaic_0001>

<llo_original>
// kernel: tpu_custom_call.1
$region0: #{tpu_custom_call.1}
  #allocation0 [shape = 'u32[]', space=smem, size = 0x4, offset = 0x4, fixed_abs, tag = 'smem constant byte address 0x4 - core index']
  #allocation1 [shape = 'u32[72,128]{1,0:T(1,128)}', space=vmem, size = 0x9000, scoped, tag = 'internal scratch']
  %s0 = inlined_call_operand.hbm [shape: f32[8,16], index: 0, kind: input, shape index: {}]
  %s1 = inlined_call_operand.hbm [shape: f32[16,128], index: 1, kind: input, shape index: {}]
  %s2 = inlined_call_operand.vmem [shape: f32[1,128], index: 2, kind: input, shape index: {}]
  %s3 = inlined_call_operand.hbm [shape: f32[128,128], index: 3, kind: input, shape index: {}]
  %s4 = inlined_call_operand.vmem [shape: f32[1,128], index: 4, kind: input, shape index: {}]
  %s5 = inlined_call_operand.hbm [shape: f32[128,128], index: 5, kind: input, shape index: {}]
  %s6 = inlined_call_operand.vmem [shape: f32[1,128], index: 6, kind: input, shape index: {}]
  %s7 = inlined_call_operand.hbm [shape: f32[8,128], index: 7, kind: output, shape index: {}]
  %s8 = sld [smem:[#allocation0]]
  $region54: #{tpu_custom_call.1} parent=0
    _
  %s10 = ssub.s32 1, %s8
  %s11 = scalar_select 0, %s10, %s8
  $region1: #{tpu_custom_call.1} parent=0
    #allocation2 [shape = 'u8[4096]{0}', space=vmem, size = 0x1000, scoped, tag = 'input window, operand 0, single buffered']
    #allocation3 [shape = 's32[1]{0}', space=sflag, size = 0x4, scoped, tag = 'scoped memory for tpu_custom_call.1']
    #allocation4 [shape = 's32[1]{0}', space=sflag, size = 0x4, scoped, tag = 'scoped memory for tpu_custom_call.1']
    #allocation5 [shape = 'u8[8192]{0}', space=vmem, size = 0x2000, scoped, tag = 'input window, operand 1, single buffered']
    #allocation6 [shape = 's32[1]{0}', space=sflag, size = 0x4, scoped, tag = 'scoped memory for tpu_custom_call.1']
    #allocation7 [shape = 'u8[65536]{0}', space=vmem, size = 0x10000, scoped, tag = 'input window, operand 3, single buffered']
    #allocation8 [shape = 'u8[65536]{0}', space=vmem, size = 0x10000, scoped, tag = 'input window, operand 5, single buffered']
    #allocation9 [shape = 's32[1]{0}', space=sflag, size = 0x4, scoped, tag = 'scoped memory for tpu_custom_call.1']
    #allocation10 [shape = 'u8[4096]{0}', space=vmem, size = 0x1000, scoped, tag = 'output window, operand 0, single buffered']
    %12 = vsyncpa [#allocation3], 0
    %13 = vsyncpa [#allocation6], 0
    %14 = vsyncpa [#allocation9], 0
    %15 = vsyncpa [#allocation4], 0
    // Predicated region
    $region2: #{tpu_custom_call.1} parent=1 // pred_check
      _
    $region3: #{tpu_custom_call.1} parent=1 // pred_check_branch
      %17 = sbr.rel (0) target = $region5
    $region4: #{tpu_custom_call.1} parent=1 // pred_region
      %19 = vsyncadd [#allocation3], 0
      %s21 = sshll.u32 %s0, 4
      %s22 = int_to_ptr.hbm [resolvable:$true] %s21
      %s23 = sshll.u32 [#allocation2], 4
      %s24 = int_to_ptr.vmem [resolvable:$true] %s23
      %26 = dma.hbm_to_vmem [thread:$0]  %s22, 128, %s24, [#allocation3]
    $region5: #{tpu_custom_call.1} parent=1 // pred_fallthru
      _
    // Predicated region
    $region6: #{tpu_custom_call.1} parent=1 // pred_check
      _
    $region7: #{tpu_custom_call.1} parent=1 // pred_check_branch
      %28 = sbr.rel (0) target = $region9
    $region8: #{tpu_custom_call.1} parent=1 // pred_region
      %30 = vsyncadd [#allocation6], 0
      %s31 = sshll.u32 %s1, 4
      %s32 = int_to_ptr.hbm [resolvable:$true] %s31
      %s33 = sshll.u32 [#allocation5], 4
      %s34 = int_to_ptr.vmem [resolvable:$true] %s33
      %39 = dma.hbm_to_vmem [thread:$0]  %s32, 256, %s34, [#allocation6], 128, 128, 8
    $region9: #{tpu_custom_call.1} parent=1 // pred_fallthru
      _
    // Predicated region
    $region10: #{tpu_custom_call.1} parent=1 // pred_check
      _
    $region11: #{tpu_custom_call.1} parent=1 // pred_check_branch
      %41 = sbr.rel (0) target = $region13
    $region12: #{tpu_custom_call.1} parent=1 // pred_region
      _
    $region13: #{tpu_custom_call.1} parent=1 // pred_fallthru
      _
    // Predicated region
    $region14: #{tpu_custom_call.1} parent=1 // pred_check
      _
    $region15: #{tpu_custom_call.1} parent=1 // pred_check_branch
      %43 = sbr.rel (0) target = $region17
    $region16: #{tpu_custom_call.1} parent=1 // pred_region
      %45 = vsyncadd [#allocation6], 0
      %s46 = sshll.u32 %s3, 4
      %s47 = int_to_ptr.hbm [resolvable:$true] %s46
      %s48 = sshll.u32 [#allocation7], 4
      %s49 = int_to_ptr.vmem [resolvable:$true] %s48
      %54 = dma.hbm_to_vmem [thread:$0]  %s47, 2048, %s49, [#allocation6], 128, 128, 8
    $region17: #{tpu_custom_call.1} parent=1 // pred_fallthru
      _
    // Predicated region
    $region18: #{tpu_custom_call.1} parent=1 // pred_check
      _
    $region19: #{tpu_custom_call.1} parent=1 // pred_check_branch
      %56 = sbr.rel (0) target = $region21
    $region20: #{tpu_custom_call.1} parent=1 // pred_region
      _
    $region21: #{tpu_custom_call.1} parent=1 // pred_fallthru
      _
    // Predicated region
    $region22: #{tpu_custom_call.1} parent=1 // pred_check
      _
    $region23: #{tpu_custom_call.1} parent=1 // pred_check_branch
      %58 = sbr.rel (0) target = $region25
    $region24: #{tpu_custom_call.1} parent=1 // pred_region
      %60 = vsyncadd [#allocation9], 0
      %s61 = sshll.u32 %s5, 4
      %s62 = int_to_ptr.hbm [resolvable:$true] %s61
      %s63 = sshll.u32 [#allocation8], 4
      %s64 = int_to_ptr.vmem [resolvable:$true] %s63
      %69 = dma.hbm_to_vmem [thread:$0]  %s62, 2048, %s64, [#allocation9], 128, 128, 8
    $region25: #{tpu_custom_call.1} parent=1 // pred_fallthru
      _
    // Predicated region
    $region26: #{tpu_custom_call.1} parent=1 // pred_check
      _
    $region27: #{tpu_custom_call.1} parent=1 // pred_check_branch
      %71 = sbr.rel (0) target = $region29
    $region28: #{tpu_custom_call.1} parent=1 // pred_region
      _
    $region29: #{tpu_custom_call.1} parent=1 // pred_fallthru
      _
    // Predicated region
    $region30: #{tpu_custom_call.1} parent=1 // pred_check
      _
    $region31: #{tpu_custom_call.1} parent=1 // pred_check_branch
      %73 = sbr.rel (0) target = $region33
    $region32: #{tpu_custom_call.1} parent=1 // pred_region
      %75 = dma.done [#allocation3], 128
    $region33: #{tpu_custom_call.1} parent=1 // pred_fallthru
      _
    // Predicated region
    $region34: #{tpu_custom_call.1} parent=1 // pred_check
      _
    $region35: #{tpu_custom_call.1} parent=1 // pred_check_branch
      %77 = sbr.rel (0) target = $region37
    $region36: #{tpu_custom_call.1} parent=1 // pred_region
      %79 = dma.done [#allocation6], 256
    $region37: #{tpu_custom_call.1} parent=1 // pred_fallthru
      _
    // Predicated region
    $region38: #{tpu_custom_call.1} parent=1 // pred_check
      _
    $region39: #{tpu_custom_call.1} parent=1 // pred_check_branch
      %81 = sbr.rel (0) target = $region41
    $region40: #{tpu_custom_call.1} parent=1 // pred_region
      %83 = dma.done [#allocation6], 2048
    $region41: #{tpu_custom_call.1} parent=1 // pred_fallthru
      _
    // Predicated region
    $region42: #{tpu_custom_call.1} parent=1 // pred_check
      _
    $region43: #{tpu_custom_call.1} parent=1 // pred_check_branch
      %85 = sbr.rel (0) target = $region45
    $region44: #{tpu_custom_call.1} parent=1 // pred_region
      %87 = dma.done [#allocation9], 2048
    $region45: #{tpu_custom_call.1} parent=1 // pred_fallthru
      _
    %v88 = vld [vmem:[#allocation2] sm:$0xff]
    %v89 = vld [vmem:[#allocation5] sm:$0xff]
    %v90 = vld [vmem:[#allocation5 + $0x8] sm:$0xff]
    %v91 = vld [vmem:[%s2] sm:$0x1]
    %v93 = vperm.slane %v91, 0
    %vm95 = vcmask 130048
    %v97 = vsel %vm95, %v88, 0
    %99 = vmatpush.msra.mxu0 0.0
    %100 = vmatpush.msra.mxu0 0.0
    %101 = vmatpush.msra.mxu0 0.0
    %102 = vmatpush.msra.mxu0 0.0
    %103 = vmatpush.msra.mxu0 0.0
    %104 = vmatpush.msra.mxu0 0.0
    %105 = vmatpush.msra.mxu0 0.0
    %106 = vmatpush.msra.mxu0 0.0
    %107 = vmatpush.msra.mxu0 0.0
    %108 = vmatpush.msra.mxu0 0.0
    %109 = vmatpush.msra.mxu0 0.0
    %110 = vmatpush.msra.mxu0 0.0
    %111 = vmatpush.msra.mxu0 0.0
    %112 = vmatpush.msra.mxu0 0.0
    %113 = vmatpush.msra.mxu0 %v90
    %114 = vmatpush.msra.mxu0 %v89
    %115 = vmatmul.f32.gmra.mxu0 %v97
    %v116 = vpop.f32.mrf.mxu0
    %v117 = vadd.f32 %v93, %v116
    %118 = vdwg.mxu0
    %v119 = vmax.f32 %v117, 0.0
    %v120 = vld [vmem:[#allocation7] sm:$0xff]
    %v121 = vld [vmem:[#allocation7 + $0x8] sm:$0xff]
    %v122 = vld [vmem:[#allocation7 + $0x10] sm:$0xff]
    %v123 = vld [vmem:[#allocation7 + $0x18] sm:$0xff]
    %v124 = vld [vmem:[#allocation7 + $0x20] sm:$0xff]
    %v125 = vld [vmem:[#allocation7 + $0x28] sm:$0xff]
    %v126 = vld [vmem:[#allocation7 + $0x30] sm:$0xff]
    %v127 = vld [vmem:[#allocation7 + $0x38] sm:$0xff]
    %v128 = vld [vmem:[#allocation7 + $0x40] sm:$0xff]
    %v129 = vld [vmem:[#allocation7 + $0x48] sm:$0xff]
    %v130 = vld [vmem:[#allocation7 + $0x50] sm:$0xff]
    %v131 = vld [vmem:[#allocation7 + $0x58] sm:$0xff]
    %v132 = vld [vmem:[#allocation7 + $0x60] sm:$0xff]
    %v133 = vld [vmem:[#allocation7 + $0x68] sm:$0xff]
    %v134 = vld [vmem:[#allocation7 + $0x70] sm:$0xff]
    %v135 = vld [vmem:[#allocation7 + $0x78] sm:$0xff]
    %v136 = vld [vmem:[%s4] sm:$0x1]
    %v138 = vperm.slane %v136, 0
    %140 = vmatpush.msra.mxu0 %v135
    %141 = vmatpush.msra.mxu0 %v134
    %142 = vmatpush.msra.mxu0 %v133
    %143 = vmatpush.msra.mxu0 %v132
    %144 = vmatpush.msra.mxu0 %v131
    %145 = vmatpush.msra.mxu0 %v130
    %146 = vmatpush.msra.mxu0 %v129
    %147 = vmatpush.msra.mxu0 %v128
    %148 = vmatpush.msra.mxu0 %v127
    %149 = vmatpush.msra.mxu0 %v126
    %150 = vmatpush.msra.mxu0 %v125
    %151 = vmatpush.msra.mxu0 %v124
    %152 = vmatpush.msra.mxu0 %v123
    %153 = vmatpush.msra.mxu0 %v122
    %154 = vmatpush.msra.mxu0 %v121
    %155 = vmatpush.msra.mxu0 %v120
    %156 = vmatmul.f32.gmra.mxu0 %v119
    %v157 = vpop.f32.mrf.mxu0
    %v158 = vadd.f32 %v138, %v157
    %159 = vdwg.mxu0
    %v160 = vmax.f32 %v158, 0.0
    %v161 = vld [vmem:[#allocation8] sm:$0xff]
    %v162 = vld [vmem:[#allocation8 + $0x8] sm:$0xff]
    %v163 = vld [vmem:[#allocation8 + $0x10] sm:$0xff]
    %v164 = vld [vmem:[#allocation8 + $0x18] sm:$0xff]
    %v165 = vld [vmem:[#allocation8 + $0x20] sm:$0xff]
    %v166 = vld [vmem:[#allocation8 + $0x28] sm:$0xff]
    %v167 = vld [vmem:[#allocation8 + $0x30] sm:$0xff]
    %v168 = vld [vmem:[#allocation8 + $0x38] sm:$0xff]
    %v169 = vld [vmem:[#allocation8 + $0x40] sm:$0xff]
    %v170 = vld [vmem:[#allocation8 + $0x48] sm:$0xff]
    %v171 = vld [vmem:[#allocation8 + $0x50] sm:$0xff]
    %v172 = vld [vmem:[#allocation8 + $0x58] sm:$0xff]
    %v173 = vld [vmem:[#allocation8 + $0x60] sm:$0xff]
    %v174 = vld [vmem:[#allocation8 + $0x68] sm:$0xff]
    %v175 = vld [vmem:[#allocation8 + $0x70] sm:$0xff]
    %v176 = vld [vmem:[#allocation8 + $0x78] sm:$0xff]
    %v177 = vld [vmem:[%s6] sm:$0x1]
    %v179 = vperm.slane %v177, 0
    %181 = vmatpush.msra.mxu0 %v176
    %182 = vmatpush.msra.mxu0 %v175
    %183 = vmatpush.msra.mxu0 %v174
    %184 = vmatpush.msra.mxu0 %v173
    %185 = vmatpush.msra.mxu0 %v172
    %186 = vmatpush.msra.mxu0 %v171
    %187 = vmatpush.msra.mxu0 %v170
    %188 = vmatpush.msra.mxu0 %v169
    %189 = vmatpush.msra.mxu0 %v168
    %190 = vmatpush.msra.mxu0 %v167
    %191 = vmatpush.msra.mxu0 %v166
    %192 = vmatpush.msra.mxu0 %v165
    %193 = vmatpush.msra.mxu0 %v164
    %194 = vmatpush.msra.mxu0 %v163
    %195 = vmatpush.msra.mxu0 %v162
    %196 = vmatpush.msra.mxu0 %v161
    %197 = vmatmul.f32.gmra.mxu0 %v160
    %v198 = vpop.f32.mrf.mxu0
    %v199 = vadd.f32 %v179, %v198
    %200 = vdwg.mxu0
    %201 = vst [vmem:[#allocation10] sm:$0xff] %v199
    // Predicated region
    $region46: #{tpu_custom_call.1} parent=1 // pred_check
      _
    $region47: #{tpu_custom_call.1} parent=1 // pred_check_branch
      %203 = sbr.rel (0) target = $region49
    $region48: #{tpu_custom_call.1} parent=1 // pred_region
      %205 = vsyncadd [#allocation4], 0
      %s207 = sshll.u32 [#allocation10], 4
      %s208 = int_to_ptr.vmem [resolvable:$true] %s207
      %s209 = sshll.u32 %s7, 4
      %s210 = int_to_ptr.hbm [resolvable:$true] %s209
      %212 = dma.vmem_to_hbm [thread:$0]  %s208, 128, %s210, [#allocation4]
    $region49: #{tpu_custom_call.1} parent=1 // pred_fallthru
      _
    // Predicated region
    $region50: #{tpu_custom_call.1} parent=1 // pred_check
      _
    $region51: #{tpu_custom_call.1} parent=1 // pred_check_branch
      %214 = sbr.rel (0) target = $region53
    $region52: #{tpu_custom_call.1} parent=1 // pred_region
      %216 = dma.done [#allocation4], 128
    $region53: #{tpu_custom_call.1} parent=1 // pred_fallthru
      _
    %217 = vsyncpa [#allocation3], 1
    %218 = vsyncpa [#allocation6], 1
    %219 = vsyncpa [#allocation9], 1
    %220 = vsyncpa [#allocation4], 1

</llo_original>
